<compile_context>
chip_gen: v7x
topology: tpu7x:2x2x1
jax: 0.10.0
libtpu: 0.0.40
codegen_flags: <defaults>
</compile_context>

<pallas_src>
import jax
import jax.numpy as jnp
from jax.experimental import pallas as pl
from jax.experimental.pallas import tpu as pltpu


def _deconv_gemm_kernel(w_ref, x_ref, b_ref, o_ref):
    # w_ref: (tn, C_in)   rows ordered (co, kd, kh, kw); tiny, grid-invariant
    # x_ref: (C_in, tm)   spatial tile of x in native NCDHW layout
    # b_ref: (tn, 1)      bias repeated 8x per output channel (float32)
    # o_ref: (tn, tm)     transposed GEMM tile (lane dim = spatial -> dense vst)
    acc = jnp.dot(w_ref[...], x_ref[...], preferred_element_type=jnp.float32)
    # Bias add + cast stay in-kernel: VPU slack under the output DMA (review).
    o_ref[...] = (acc + b_ref[...]).astype(o_ref.dtype)


def _vmem_budget():
    """(double_buffered_budget_bytes, vmem_limit_cap_bytes) for this chip."""
    cap = 64 << 20  # conservative default: v7x has 64 MiB VMEM per TensorCore
    try:
        if hasattr(pltpu, "get_tpu_info"):
            info = pltpu.get_tpu_info()
            cap = int(getattr(info, "vmem_capacity_bytes", cap)) or cap
    except Exception:
        pass
    if cap > (96 << 20):            # 128 MiB parts: v5e / v6e
        return 88 << 20, 100 << 20
    return 36 << 20, 48 << 20       # 64 MiB parts: v7x (leave Mosaic headroom)


def _tn_candidates(n_out):
    """Divisors of n_out usable as the 2nd-minor block dim (mult of 8 or full)."""
    divs = set()
    i = 1
    while i * i <= n_out:
        if n_out % i == 0:
            divs.add(i)
            divs.add(n_out // i)
        i += 1
    return sorted([d for d in divs if d == n_out or d % 8 == 0], reverse=True)


def _pick_tiles(n, c_in, n_out, dhw, tm_req, x_bytes, out_bytes, budget):
    """Pick (tm, tn) and the estimated per-step VMEM footprint."""
    tn_opts = _tn_candidates(n_out)
    limit = min(n_out, 4096)
    tn = next(t for t in tn_opts if t <= limit)

    if dhw <= tm_req:
        tm = dhw                                    # full-extent spatial tile
    else:
        tm = max(128, (tm_req // 128) * 128)        # 128-aligned lane tile

    def footprint(tm_, tn_):
        wb = 1 if tn_ == n_out else 2               # Buffered(1) when invariant
        x_blk = c_in * tm_ * x_bytes * 2            # double-buffered input
        o_blk = tn_ * tm_ * out_bytes * 2           # double-buffered output
        w_blk = tn_ * c_in * x_bytes * wb
        b_blk = tn_ * 4 * wb
        return x_blk + o_blk + w_blk + b_blk

    while footprint(tm, tn) > budget:
        if tm > 128 and dhw > 128:
            new_tm = max(128, ((tm // 2) // 128) * 128)
            if dhw <= new_tm:
                new_tm = dhw
            if new_tm < tm:
                tm = new_tm
                continue
        smaller = [t for t in tn_opts if t < tn]
        if not smaller:
            break                                   # floors reached; accept
        tn = smaller[0]

    # v7x has 2 TensorCores: guarantee >= 2 steps on a "parallel" axis.
    steps = n * (n_out // tn) * (-(-dhw // tm))
    if steps < 2:
        if dhw >= 256:
            tm = max(128, ((dhw // 2) // 128) * 128)
        else:
            smaller = [t for t in tn_opts if t < n_out]
            if smaller:
                tn = smaller[0]
    return tm, tn, footprint(tm, tn)


def _maybe_single_buffered(shape, index_map, single):
    """BlockSpec; single-buffered (pl.Buffered(1)) when grid-invariant."""
    if single and hasattr(pl, "Buffered"):
        try:
            return pl.BlockSpec(shape, index_map, pipeline_mode=pl.Buffered(1))
        except TypeError:
            pass
    return pl.BlockSpec(shape, index_map)


def single_deconv3d_block(x, weight, bias, *, tm=1024, out_dtype=None,
                          interleave=True):
    """ConvTranspose3d(kernel_size=2, stride=2, padding=0) forward.

    x:      (N, C_in, D, H, W).  Compute dtype follows x.dtype (pass bf16 x
            upstream for the reduced-bandwidth path; the wrapper does NOT cast
            because that would be its own HBM pass).
    weight: (C_in, C_out, 2, 2, 2)  PyTorch ConvTranspose3d layout.
    bias:   (C_out,)
    out_dtype: output dtype (default x.dtype). bf16 halves the dominant
            output-store and epilogue traffic; accumulation stays float32.
    interleave: True  -> exact module output (N, C_out, 2D, 2H, 2W).
                False -> tap-major (N, C_out, 2, 2, 2, D, H, W) with NO
                         epilogue; element [n,co,kd,kh,kw,d,h,w] equals the
                         module's out[n,co,2d+kd,2h+kh,2w+kw].
    """
    n, c_in, d, h, w = x.shape
    c_out = weight.shape[1]
    dhw = d * h * w
    n_out = c_out * 8
    out_dtype = jnp.dtype(x.dtype if out_dtype is None else out_dtype)

    # Cheap layout plumbing only: free reshape of x, tiny weight transpose.
    x3 = x.reshape(n, c_in, dhw)                           # native layout, NO transpose
    wt = weight.reshape(c_in, n_out).T.astype(x.dtype)     # (n_out, c_in), rows=(co,kd,kh,kw)
    b2 = jnp.repeat(bias.astype(jnp.float32), 8).reshape(n_out, 1)

    budget, vmem_cap = _vmem_budget()
    x_bytes = jnp.dtype(x3.dtype).itemsize
    tm, tn, fp = _pick_tiles(n, c_in, n_out, dhw, tm, x_bytes,
                             out_dtype.itemsize, budget)
    grid = (n, n_out // tn, pl.cdiv(dhw, tm))              # (batch, Cout*8 tiles, spatial)
    vmem_limit = int(min(vmem_cap, max(32 << 20, fp + (8 << 20))))
    invariant = (n_out // tn == 1)

    y = pl.pallas_call(
        _deconv_gemm_kernel,
        out_shape=jax.ShapeDtypeStruct((n, n_out, dhw), out_dtype),
        grid=grid,
        in_specs=[
            # Weight / bias: grid-invariant -> single VMEM buffer (frees VMEM,
            # keeps tm large on v7x's 64 MiB).
            _maybe_single_buffered((tn, c_in), lambda b, j, i: (j, 0), invariant),
            # x: (C_in, tm) spatial tile, batch dim squeezed out.
            pl.BlockSpec((None, c_in, tm), lambda b, j, i: (b, 0, i)),
            _maybe_single_buffered((tn, 1), lambda b, j, i: (j, 0), invariant),
        ],
        out_specs=pl.BlockSpec((None, tn, tm), lambda b, j, i: (b, j, i)),
        compiler_params=pltpu.CompilerParams(
            dimension_semantics=("parallel", "parallel", "parallel"),
            vmem_limit_bytes=vmem_limit,
        ),
    )(wt, x3, b2)

    y = y.reshape(n, c_out, 2, 2, 2, d, h, w)              # free reshape (axis splits)
    if not interleave:
        return y                                           # tap-major, no epilogue

    # Epilogue: scatter the 2x2x2 taps back into the upsampled NCDHW volume.
    # TODO(synk): this is the one remaining full-volume XLA pass; moving the
    # (w,kw) lane interleave in-kernel needs stride-2 lane stores / minor-dim
    # relayouts that do not lower robustly on Mosaic today.
    y = jnp.transpose(y, (0, 1, 5, 2, 6, 3, 7, 4))         # (N,C_out,D,kd,H,kh,W,kw)
    return y.reshape(n, c_out, 2 * d, 2 * h, 2 * w)


if __name__ == "__main__":
    key = jax.random.PRNGKey(0)
    k_x, k_w, k_b = jax.random.split(key, 3)

    # Small shapes consistent with the module: batch=2, in_planes=4,
    # out_planes=8, spatial 8x8x8  ->  output (2, 8, 16, 16, 16).
    N, C_in, C_out, D, H, W = 2, 4, 8, 8, 8, 8

    x = jax.random.normal(k_x, (N, C_in, D, H, W), dtype=jnp.float32)
    weight = 0.1 * jax.random.normal(k_w, (C_in, C_out, 2, 2, 2), dtype=jnp.float32)
    bias = 0.1 * jax.random.normal(k_b, (C_out,), dtype=jnp.float32)

    fwd = jax.jit(single_deconv3d_block,
                  static_argnames=("tm", "out_dtype", "interleave"))

    # Independent reference (pure JAX einsum over the same math).
    ref = jnp.einsum("ncdhw,coijk->nodihjwk", x, weight)
    ref = ref.reshape(N, C_out, 2 * D, 2 * H, 2 * W) + bias[None, :, None, None, None]

    # 1) Exact float32 module semantics (default path).
    out = jax.block_until_ready(fwd(x, weight, bias))
    assert out.shape == (N, C_out, 2 * D, 2 * H, 2 * W), out.shape
    max_err = float(jnp.max(jnp.abs(out - ref)))
    assert jnp.allclose(out, ref, atol=1e-5, rtol=1e-5), max_err

    # 2) Tap-major (no-epilogue) layout is a pure re-indexing of the same values.
    tap = jax.block_until_ready(fwd(x, weight, bias, interleave=False))
    tap_i = jnp.transpose(tap, (0, 1, 5, 2, 6, 3, 7, 4)).reshape(out.shape)
    assert jnp.allclose(tap_i, ref, atol=1e-5, rtol=1e-5)

    # 3) Reduced-bandwidth bf16-output path (f32 accumulation, bf16 store).
    out_b = jax.block_until_ready(fwd(x, weight, bias, out_dtype=jnp.bfloat16))
    assert out_b.dtype == jnp.bfloat16
    assert jnp.allclose(out_b.astype(jnp.float32), ref, atol=3e-2, rtol=3e-2)

    print("KERNEL_OK")
</pallas_src>

<mosaic_0001>
module attributes {stable_mosaic.version = 11 : i64} {
  func.func @_deconv_gemm_kernel(%arg0: i32, %arg1: i32, %arg2: i32, %arg3: memref<64x4xf32, #tpu.memory_space<vmem>>, %arg4: memref<1x4x512xf32, #tpu.memory_space<vmem>>, %arg5: memref<64x1xf32, #tpu.memory_space<vmem>>, %arg6: memref<1x64x512xf32, #tpu.memory_space<vmem>>) attributes {dimension_semantics = [#tpu.dimension_semantics<parallel>, #tpu.dimension_semantics<parallel>, #tpu.dimension_semantics<parallel>], iteration_bounds = array<i64: 2, 1, 1>, scalar_prefetch = 0 : i64, scratch_operands = 0 : i64, tpu.core_type = #tpu.core_type<tc>, window_params = [{pipeline_mode = #tpu.pipeline_mode<synchronous>, transform_indices = @transform_0, window_bounds = array<i64: 64, 4>}, {transform_indices = @transform_1, window_bounds = array<i64: 1, 4, 512>}, {pipeline_mode = #tpu.pipeline_mode<synchronous>, transform_indices = @transform_2, window_bounds = array<i64: 64, 1>}, {transform_indices = @transform_3, window_bounds = array<i64: 1, 64, 512>}]} {
    %c0 = arith.constant 0 : index
    %c0_0 = arith.constant 0 : index
    %0 = vector.load %arg3[%c0, %c0_0] : memref<64x4xf32, #tpu.memory_space<vmem>>, vector<64x4xf32>
    %c0_1 = arith.constant 0 : index
    %c0_2 = arith.constant 0 : index
    %c0_3 = arith.constant 0 : index
    %1 = vector.load %arg4[%c0_1, %c0_2, %c0_3] : memref<1x4x512xf32, #tpu.memory_space<vmem>>, vector<1x4x512xf32>
    %2 = vector.shape_cast %1 : vector<1x4x512xf32> to vector<4x512xf32>
    %cst = arith.constant dense<0.000000e+00> : vector<64x512xf32>
    %3 = tpu.matmul %0, %2, %cst {dimension_numbers = #tpu.dot_dimension_numbers<[1], [0], [0], [1], [0, 0, 1, 1], [], []>} : vector<64x4xf32>, vector<4x512xf32>, vector<64x512xf32> -> vector<64x512xf32>
    %c0_4 = arith.constant 0 : index
    %c0_5 = arith.constant 0 : index
    %4 = vector.load %arg5[%c0_4, %c0_5] : memref<64x1xf32, #tpu.memory_space<vmem>>, vector<64x1xf32>
    %5 = vector.broadcast %4 : vector<64x1xf32> to vector<64x512xf32>
    %6 = arith.addf %3, %5 : vector<64x512xf32>
    %c0_6 = arith.constant 0 : index
    %c0_7 = arith.constant 0 : index
    %c0_8 = arith.constant 0 : index
    %7 = vector.load %arg6[%c0_6, %c0_7, %c0_8] : memref<1x64x512xf32, #tpu.memory_space<vmem>>, vector<1x64x512xf32>
    %8 = vector.shape_cast %7 : vector<1x64x512xf32> to vector<64x512xf32>
    %9 = vector.shape_cast %6 : vector<64x512xf32> to vector<1x64x512xf32>
    tpu.vector_store %arg6[%c0_6, %c0_7, %c0_8], %9 {strides = array<i32>} : memref<1x64x512xf32, #tpu.memory_space<vmem>>, vector<1x64x512xf32>,
    return
  }
  func.func @transform_0(%arg0: i32, %arg1: i32, %arg2: i32) -> (i32, i32) {
    %c0_i32 = arith.constant 0 : i32
    %c0_i32_0 = arith.constant 0 : i32
    return %arg1, %c0_i32 : i32, i32
  }
  func.func @transform_1(%arg0: i32, %arg1: i32, %arg2: i32) -> (i32, i32, i32) {
    %c0_i32 = arith.constant 0 : i32
    %c0_i32_0 = arith.constant 0 : i32
    return %arg0, %c0_i32, %arg2 : i32, i32, i32
  }
  func.func @transform_2(%arg0: i32, %arg1: i32, %arg2: i32) -> (i32, i32) {
    %c0_i32 = arith.constant 0 : i32
    %c0_i32_0 = arith.constant 0 : i32
    return %arg1, %c0_i32 : i32, i32
  }
  func.func @transform_3(%arg0: i32, %arg1: i32, %arg2: i32) -> (i32, i32, i32) {
    %c0_i32 = arith.constant 0 : i32
    return %arg0, %arg1, %arg2 : i32, i32, i32
  }
}

</mosaic_0001>

<llo_original>
// kernel: single_deconv3d_block.1
$region0: #{single_deconv3d_block.1}
  #allocation0 [shape = 'u32[]', space=smem, size = 0x4, offset = 0x4, fixed_abs, tag = 'smem constant byte address 0x4 - core index']
  #allocation1 [shape = 'u32[144,128]{1,0:T(1,128)}', space=vmem, size = 0x12000, scoped, tag = 'internal scratch']
  %s0 = inlined_call_operand.vmem [shape: f32[64,4], index: 0, kind: input, shape index: {}]
  %s1 = inlined_call_operand.vmem [shape: f32[2,4,512], index: 1, kind: input, shape index: {}]
  %s2 = inlined_call_operand.vmem [shape: f32[64,1], index: 2, kind: input, shape index: {}]
  %s3 = inlined_call_operand.vmem [shape: f32[2,64,512], index: 3, kind: output, shape index: {}]
  %s4 = sld [smem:[#allocation0]]
  $region45: #{single_deconv3d_block.1} parent=0
    _
  %s6 = ssub.s32 1, %s4
  %s7 = scalar_select 0, %s6, %s4
  loop: start=0, step=1, limit=4
  $region2: #{single_deconv3d_block.1} parent=0 // loop_pre_header
    _
  $region3: #{single_deconv3d_block.1} parent=0 // loop_header
    %s9 = sphi 0, %s13
    %p10 = scmp.ge.s32.totalorder %s9, 4
    %s16 = sphi 0, %s35
    %s17 = sphi 0, %s31
    %s18 = sphi 0, %s27
    %s19 = sphi 0, %s16
    %s20 = sphi 0, %s17
    %s21 = sphi 0, %s18
    %s22 = sphi 0, %s19
    %s23 = sphi 0, %s20
    %s24 = sphi 0, %s21
    %s38 = sphi 0, %s40
    %s41 = sphi 0, %s38
    %s42 = sphi 0, %s41
    %s58 = sphi 0, %s42
    %s66 = sphi 0, %s68
    %s69 = sphi 0, %s66
    %s70 = sphi 0, %s69
    %s86 = sphi 0, %s70
    %s92 = sphi 0, %s94
    %s95 = sphi 0, %s92
    %s96 = sphi 0, %s95
    %s112 = sphi 0, %s96
    %s122 = sphi 0, %s124
    %s125 = sphi 0, %s122
    %s126 = sphi 0, %s125
    %s142 = sphi 0, %s126
  $region4: #{single_deconv3d_block.1} parent=0 // loop_header_branch
    %12 = sbr.rel (%p10) target = $region8
  $region5: #{single_deconv3d_block.1} parent=0 // loop_body
    %s14 = ssub.s32 %s9, 1
    %s15 = ssub.s32 %s9, 2
    %s25 = sadd.s32 1, %s18
    %p26 = scmp.ge.s32.totalorder %s25, 1
    %s27 = scalar_select %p26, 0, %s25
    %s28 = sadd.s32 1, %s17
    %s29 = scalar_select %p26, %s28, %s17
    %p30 = scmp.ge.s32.totalorder %s29, 1
    %s31 = scalar_select %p30, 0, %s29
    %s32 = sadd.s32 1, %s16
    %s33 = scalar_select %p30, %s32, %s16
    %p34 = scmp.ge.s32.totalorder %s33, 2
    %s35 = scalar_select %p34, 0, %s33
    %s36 = ssub.s32 %s17, %s31
    %p37 = scmp.eq.s32.totalorder %s36, 0
    %s39 = sadd.s32 %s38, 1
    %s40 = scalar_select %p37, %s38, %s39
    %p43 = pneg %p37
    %p44 = scmp.eq.s32.totalorder %s9, 1
    %p45 = por %p43, %p44
    %p46 = scmp.ne.s32.totalorder %s38, %s41
    %p47 = scmp.eq.s32.totalorder %s9, 0
    %p48 = por %p46, %p47
    %p49 = scmp.ne.s32.totalorder %s38, %s41
    %p50 = scmp.eq.s32.totalorder %s14, 1
    %p51 = por %p49, %p50
    %p52 = scmp.ne.s32.totalorder %s41, %s42
    %p53 = scmp.eq.s32.totalorder %s14, 0
    %p54 = por %p52, %p53
    %p55 = scmp.ne.s32.totalorder %s41, %s42
    %p56 = scmp.eq.s32.totalorder %s15, 1
    %p57 = por %p55, %p56
    %p59 = scmp.ne.s32.totalorder %s42, %s58
    %p60 = scmp.eq.s32.totalorder %s15, 0
    %p61 = por %p59, %p60
    %s62 = ssub.s32 %s16, %s35
    %s63 = ssub.s32 %s18, %s27
    %s64 = sor.u32 %s62, %s63
    %p65 = scmp.eq.s32.totalorder %s64, 0
    %s67 = sadd.s32 %s66, 1
    %s68 = scalar_select %p65, %s66, %s67
    %p71 = pneg %p65
    %p72 = scmp.eq.s32.totalorder %s9, 1
    %p73 = por %p71, %p72
    %p74 = scmp.ne.s32.totalorder %s66, %s69
    %p75 = scmp.eq.s32.totalorder %s9, 0
    %p76 = por %p74, %p75
    %p77 = scmp.ne.s32.totalorder %s66, %s69
    %p78 = scmp.eq.s32.totalorder %s14, 1
    %p79 = por %p77, %p78
    %p80 = scmp.ne.s32.totalorder %s69, %s70
    %p81 = scmp.eq.s32.totalorder %s14, 0
    %p82 = por %p80, %p81
    %p83 = scmp.ne.s32.totalorder %s69, %s70
    %p84 = scmp.eq.s32.totalorder %s15, 1
    %p85 = por %p83, %p84
    %p87 = scmp.ne.s32.totalorder %s70, %s86
    %p88 = scmp.eq.s32.totalorder %s15, 0
    %p89 = por %p87, %p88
    %s90 = ssub.s32 %s17, %s31
    %p91 = scmp.eq.s32.totalorder %s90, 0
    %s93 = sadd.s32 %s92, 1
    %s94 = scalar_select %p91, %s92, %s93
    %p97 = pneg %p91
    %p98 = scmp.eq.s32.totalorder %s9, 1
    %p99 = por %p97, %p98
    %p100 = scmp.ne.s32.totalorder %s92, %s95
    %p101 = scmp.eq.s32.totalorder %s9, 0
    %p102 = por %p100, %p101
    %p103 = scmp.ne.s32.totalorder %s92, %s95
    %p104 = scmp.eq.s32.totalorder %s14, 1
    %p105 = por %p103, %p104
    %p106 = scmp.ne.s32.totalorder %s95, %s96
    %p107 = scmp.eq.s32.totalorder %s14, 0
    %p108 = por %p106, %p107
    %p109 = scmp.ne.s32.totalorder %s95, %s96
    %p110 = scmp.eq.s32.totalorder %s15, 1
    %p111 = por %p109, %p110
    %p113 = scmp.ne.s32.totalorder %s96, %s112
    %p114 = scmp.eq.s32.totalorder %s15, 0
    %p115 = por %p113, %p114
    %s116 = ssub.s32 %s16, %s35
    %s117 = ssub.s32 %s17, %s31
    %s118 = sor.u32 %s116, %s117
    %s119 = ssub.s32 %s18, %s27
    %s120 = sor.u32 %s118, %s119
    %p121 = scmp.eq.s32.totalorder %s120, 0
    %s123 = sadd.s32 %s122, 1
    %s124 = scalar_select %p121, %s122, %s123
    %p127 = pneg %p121
    %p128 = scmp.eq.s32.totalorder %s9, 1
    %p129 = por %p127, %p128
    %p130 = scmp.ne.s32.totalorder %s122, %s125
    %p131 = scmp.eq.s32.totalorder %s9, 0
    %p132 = por %p130, %p131
    %p133 = scmp.ne.s32.totalorder %s122, %s125
    %p134 = scmp.eq.s32.totalorder %s14, 1
    %p135 = por %p133, %p134
    %p136 = scmp.ne.s32.totalorder %s125, %s126
    %p137 = scmp.eq.s32.totalorder %s14, 0
    %p138 = por %p136, %p137
    %p139 = scmp.ne.s32.totalorder %s125, %s126
    %p140 = scmp.eq.s32.totalorder %s15, 1
    %p141 = por %p139, %p140
    %p143 = scmp.ne.s32.totalorder %s126, %s142
    %p144 = scmp.eq.s32.totalorder %s15, 0
    %p145 = por %p143, %p144
    %p146 = scmp.le.s32.totalorder 1, %s9
    %p147 = scmp.lt.s32.totalorder %s9, 3
    %p148 = pnand %p146, %p147
    %p149 = pneg %p148
    // Predicated region
    $region9: #{single_deconv3d_block.1} parent=5 // pred_check
      _
    $region10: #{single_deconv3d_block.1} parent=5 // pred_check_branch
      %151 = sbr.rel (%p148) target = $region12
    $region11: #{single_deconv3d_block.1} parent=5 // pred_region
      %s152 = ssub.s32 %s9, 1
      // Predicated region
      $region13: #{single_deconv3d_block.1} parent=11 // pred_check
        %p153 = pneg %p54
      $region14: #{single_deconv3d_block.1} parent=11 // pred_check_branch
        %155 = sbr.rel (%p153) target = $region16
      $region15: #{single_deconv3d_block.1} parent=11 // pred_region
        %s156 = smul.u32 8, %s20
        %p157 = scmp.lt.s32.totalorder %s156, 7
        %s158 = scalar_select %p157, %s156, 7
        %s159 = smul.addr %s158, 8
        %s160 = scalar_lea.vmem %s0, %s159
        %s161 = smul.u32 8, %s20
      $region16: #{single_deconv3d_block.1} parent=11 // pred_fallthru
        _
      // Predicated region
      $region17: #{single_deconv3d_block.1} parent=11 // pred_check
        %p162 = pneg %p108
      $region18: #{single_deconv3d_block.1} parent=11 // pred_check_branch
        %164 = sbr.rel (%p162) target = $region20
      $region19: #{single_deconv3d_block.1} parent=11 // pred_region
        %s165 = smul.u32 8, %s20
        %p166 = scmp.lt.s32.totalorder %s165, 7
        %s167 = scalar_select %p166, %s165, 7
        %s168 = smul.addr %s167, 8
        %s169 = scalar_lea.vmem %s2, %s168
        %s170 = smul.u32 8, %s20
      $region20: #{single_deconv3d_block.1} parent=11 // pred_fallthru
        _
    $region12: #{single_deconv3d_block.1} parent=5 // pred_fallthru
      _
    %p171 = scmp.lt.s32.totalorder %s9, 2
    // Predicated region
    $region21: #{single_deconv3d_block.1} parent=5 // pred_check
      %p172 = pneg %p171
    $region22: #{single_deconv3d_block.1} parent=5 // pred_check_branch
      %174 = sbr.rel (%p172) target = $region24
    $region23: #{single_deconv3d_block.1} parent=5 // pred_region
      // Predicated region
      $region25: #{single_deconv3d_block.1} parent=23 // pred_check
        %p175 = pneg %p76
      $region26: #{single_deconv3d_block.1} parent=23 // pred_check_branch
        %177 = sbr.rel (%p175) target = $region28
      $region27: #{single_deconv3d_block.1} parent=23 // pred_region
        %s178 = smul.u32 4, %s18
        %p179 = scmp.lt.s32.totalorder %s16, 1
        %s180 = scalar_select %p179, %s16, 1
        %p181 = scmp.lt.s32.totalorder %s178, 3
        %s182 = scalar_select %p181, %s178, 3
        %s183 = smul.addr %s180, 4
        %s184 = sadd.s32 %s182, %s183
        %s185 = smul.addr %s184, 4
        %s186 = scalar_lea.vmem %s1, %s185
        %s187 = smul.u32 4, %s18
      $region28: #{single_deconv3d_block.1} parent=23 // pred_fallthru
        _
    $region24: #{single_deconv3d_block.1} parent=5 // pred_fallthru
      _
    %p188 = scmp.le.s32.totalorder 1, %s9
    %p189 = scmp.lt.s32.totalorder %s9, 3
    %p190 = pnand %p188, %p189
    %p191 = pneg %p190
    // Predicated region
    $region29: #{single_deconv3d_block.1} parent=5 // pred_check
      _
    $region30: #{single_deconv3d_block.1} parent=5 // pred_check_branch
      %193 = sbr.rel (%p190) target = $region32
    $region31: #{single_deconv3d_block.1} parent=5 // pred_region
      %s194 = ssub.s32 %s9, 1
      %s195 = smul.u32 8, %s20
      %p196 = scmp.lt.s32.totalorder %s195, 7
      %s197 = scalar_select %p196, %s195, 7
      %s198 = smul.addr %s197, 8
      %s199 = scalar_lea.vmem %s0, %s198
      %p200 = pneg %p54
      %p201 = pneg %p51
      %s202 = smul.u32 4, %s21
      %p203 = scmp.lt.s32.totalorder %s19, 1
      %s204 = scalar_select %p203, %s19, 1
      %p205 = scmp.lt.s32.totalorder %s202, 3
      %s206 = scalar_select %p205, %s202, 3
      %s207 = smul.addr %s204, 4
      %s208 = sadd.s32 %s206, %s207
      %s209 = smul.addr %s208, 4
      %s210 = scalar_lea.vmem %s1, %s209
      %p211 = pneg %p82
      %p212 = pneg %p79
      %s213 = smul.u32 8, %s20
      %p214 = scmp.lt.s32.totalorder %s213, 7
      %s215 = scalar_select %p214, %s213, 7
      %s216 = smul.addr %s215, 8
      %s217 = scalar_lea.vmem %s2, %s216
      %p218 = pneg %p108
      %p219 = pneg %p105
      %p220 = pneg %p138
      %p221 = pneg %p135
      %s222 = smul.u32 8, %s20
      %s223 = smul.u32 4, %s21
      %p224 = scmp.lt.s32.totalorder %s19, 1
      %s225 = scalar_select %p224, %s19, 1
      %p226 = scmp.lt.s32.totalorder %s222, 7
      %s227 = scalar_select %p226, %s222, 7
      %p228 = scmp.lt.s32.totalorder %s223, 3
      %s229 = scalar_select %p228, %s223, 3
      %s230 = smul.addr %s227, 4
      %s231 = sadd.s32 %s229, %s230
      %s232 = smul.addr %s225, 32
      %s233 = sadd.s32 %s231, %s232
      %s234 = smul.addr %s233, 8
      %s235 = scalar_lea.vmem %s3, %s234
      %s236 = smul.u32 8, %s20
      %p237 = scmp.lt.s32.totalorder %s236, 7
      %s238 = scalar_select %p237, %s236, 7
      %s239 = smul.addr %s238, 8
      %s240 = scalar_lea.vmem %s0, %s239
      %s241 = smul.u32 8, %s20
      %s242 = smul.u32 4, %s21
      %p243 = scmp.lt.s32.totalorder %s19, 1
      %s244 = scalar_select %p243, %s19, 1
      %p245 = scmp.lt.s32.totalorder %s242, 3
      %s246 = scalar_select %p245, %s242, 3
      %s247 = smul.addr %s244, 4
      %s248 = sadd.s32 %s246, %s247
      %s249 = smul.addr %s248, 4
      %s250 = scalar_lea.vmem %s1, %s249
      %s251 = smul.u32 4, %s21
      %s252 = smul.u32 8, %s20
      %p253 = scmp.lt.s32.totalorder %s252, 7
      %s254 = scalar_select %p253, %s252, 7
      %s255 = smul.addr %s254, 8
      %s256 = scalar_lea.vmem %s2, %s255
      %s257 = smul.u32 8, %s20
      %s258 = smul.u32 8, %s20
      %s259 = smul.u32 4, %s21
      %p260 = scmp.lt.s32.totalorder %s19, 1
      %s261 = scalar_select %p260, %s19, 1
      %p262 = scmp.lt.s32.totalorder %s258, 7
      %s263 = scalar_select %p262, %s258, 7
      %p264 = scmp.lt.s32.totalorder %s259, 3
      %s265 = scalar_select %p264, %s259, 3
      %s266 = smul.addr %s263, 4
      %s267 = sadd.s32 %s265, %s266
      %s268 = smul.addr %s261, 32
      %s269 = sadd.s32 %s267, %s268
      %s270 = smul.addr %s269, 8
      %s271 = scalar_lea.vmem %s3, %s270
      %s272 = smul.u32 8, %s20
      %s273 = smul.u32 4, %s21
      %v274 = vld [vmem:[%s240] sm:$0xff]
      %v275 = vld [vmem:[%s240 + $0x8] sm:$0xff]
      %v276 = vld [vmem:[%s240 + $0x10] sm:$0xff]
      %v277 = vld [vmem:[%s240 + $0x18] sm:$0xff]
      %v278 = vld [vmem:[%s240 + $0x20] sm:$0xff]
      %v279 = vld [vmem:[%s240 + $0x28] sm:$0xff]
      %v280 = vld [vmem:[%s240 + $0x30] sm:$0xff]
      %v281 = vld [vmem:[%s240 + $0x38] sm:$0xff]
      %v282 = vld [vmem:[%s250] sm:$0xff]
      %v283 = vld [vmem:[%s250 + $0x8] sm:$0xff]
      %v284 = vld [vmem:[%s256] sm:$0xff]
      %v285 = vld [vmem:[%s256 + $0x8] sm:$0xff]
      %v286 = vld [vmem:[%s256 + $0x10] sm:$0xff]
      %v287 = vld [vmem:[%s256 + $0x18] sm:$0xff]
      %v288 = vld [vmem:[%s256 + $0x20] sm:$0xff]
      %v289 = vld [vmem:[%s256 + $0x28] sm:$0xff]
      %v290 = vld [vmem:[%s256 + $0x30] sm:$0xff]
      %v291 = vld [vmem:[%s256 + $0x38] sm:$0xff]
      %293 = vset.pattern.permute.xlu0 0
      %294 = vperm.xlu0 %293, %v284
      %v295 = vpop.permute.xlu0 %294
      %298 = vset.pattern.permute.xlu0 0
      %299 = vperm.xlu0 %298, %v285
      %v300 = vpop.permute.xlu0 %299
      %303 = vset.pattern.permute.xlu0 0
      %304 = vperm.xlu0 %303, %v286
      %v305 = vpop.permute.xlu0 %304
      %308 = vset.pattern.permute.xlu0 0
      %309 = vperm.xlu0 %308, %v287
      %v310 = vpop.permute.xlu0 %309
      %313 = vset.pattern.permute.xlu0 0
      %314 = vperm.xlu0 %313, %v288
      %v315 = vpop.permute.xlu0 %314
      %318 = vset.pattern.permute.xlu0 0
      %319 = vperm.xlu0 %318, %v289
      %v320 = vpop.permute.xlu0 %319
      %323 = vset.pattern.permute.xlu0 0
      %324 = vperm.xlu0 %323, %v290
      %v325 = vpop.permute.xlu0 %324
      %328 = vset.pattern.permute.xlu0 0
      %329 = vperm.xlu0 %328, %v291
      %v330 = vpop.permute.xlu0 %329
      %v334 = vcombine.high %v282, %v282
      %v335 = vcombine.high %v283, %v283
      %vm336 = vcmask 31744
      %v338 = vsel %vm336, %v274, 0
      %v341 = vsel %vm336, %v275, 0
      %v344 = vsel %vm336, %v276, 0
      %v347 = vsel %vm336, %v277, 0
      %v350 = vsel %vm336, %v278, 0
      %v353 = vsel %vm336, %v279, 0
      %v356 = vsel %vm336, %v280, 0
      %v359 = vsel %vm336, %v281, 0
      %vm361 = vcmask 1043456
      %v362 = vsel %vm361, %v282, 0
      %v364 = vsel %vm361, %v334, 0
      %v366 = vsel %vm361, %v283, 0
      %v368 = vsel %vm361, %v335, 0
      %370 = vmatprep.subr.mxu0 %v364
      %371 = vmatpush1.msra.mxu0 %v362
      %372 = vmatprep.subr.mxu0 0.0
      %373 = vmatpush1.msra.mxu0 0.0
      %374 = vmatprep.subr.mxu0 0.0
      %375 = vmatpush1.msra.mxu0 0.0
      %376 = vmatprep.subr.mxu0 0.0
      %377 = vmatpush1.msra.mxu0 0.0
      %378 = vmatprep.subr.mxu0 0.0
      %379 = vmatpush1.msra.mxu0 0.0
      %380 = vmatprep.subr.mxu0 0.0
      %381 = vmatpush1.msra.mxu0 0.0
      %382 = vmatprep.subr.mxu0 0.0
      %383 = vmatpush1.msra.mxu0 0.0
      %384 = vmatprep.subr.mxu0 0.0
      %385 = vmatpush1.msra.mxu0 0.0
      %386 = vmatprep.subr.mxu0 0.0
      %387 = vmatpush1.msra.mxu0 0.0
      %388 = vmatprep.subr.mxu0 0.0
      %389 = vmatpush1.msra.mxu0 0.0
      %390 = vmatprep.subr.mxu0 0.0
      %391 = vmatpush1.msra.mxu0 0.0
      %392 = vmatprep.subr.mxu0 0.0
      %393 = vmatpush1.msra.mxu0 0.0
      %394 = vmatprep.subr.mxu0 0.0
      %395 = vmatpush1.msra.mxu0 0.0
      %396 = vmatprep.subr.mxu0 0.0
      %397 = vmatpush1.msra.mxu0 0.0
      %398 = vmatprep.subr.mxu0 0.0
      %399 = vmatpush1.msra.mxu0 0.0
      %400 = vmatprep.subr.mxu0 0.0
      %401 = vmatpush1.msra.mxu0 0.0
      %402 = vmatprep.subr.mxu0 0.0
      %403 = vmatpush1.msra.mxu0 0.0
      %404 = vmatprep.subr.mxu0 0.0
      %405 = vmatpush1.msra.mxu0 0.0
      %406 = vmatprep.subr.mxu0 0.0
      %407 = vmatpush1.msra.mxu0 0.0
      %408 = vmatprep.subr.mxu0 0.0
      %409 = vmatpush1.msra.mxu0 0.0
      %410 = vmatprep.subr.mxu0 0.0
      %411 = vmatpush1.msra.mxu0 0.0
      %412 = vmatprep.subr.mxu0 0.0
      %413 = vmatpush1.msra.mxu0 0.0
      %414 = vmatprep.subr.mxu0 0.0
      %415 = vmatpush1.msra.mxu0 0.0
      %416 = vmatprep.subr.mxu0 0.0
      %417 = vmatpush1.msra.mxu0 0.0
      %418 = vmatprep.subr.mxu0 0.0
      %419 = vmatpush1.msra.mxu0 0.0
      %420 = vmatprep.subr.mxu0 0.0
      %421 = vmatpush1.msra.mxu0 0.0
      %422 = vmatprep.subr.mxu0 0.0
      %423 = vmatpush1.msra.mxu0 0.0
      %424 = vmatprep.subr.mxu0 0.0
      %425 = vmatpush1.msra.mxu0 0.0
      %426 = vmatprep.subr.mxu0 0.0
      %427 = vmatpush1.msra.mxu0 0.0
      %428 = vmatprep.subr.mxu0 0.0
      %429 = vmatpush1.msra.mxu0 0.0
      %430 = vmatprep.subr.mxu0 0.0
      %431 = vmatpush1.msra.mxu0 0.0
      %432 = vmatprep.subr.mxu0 0.0
      %433 = vmatpush1.msra.mxu0 0.0
      %434 = vmatprep.mubr.f32.mxu0 0.0
      %435 = vmatmul.mubr.f32.gmra.mrb[0].mxu0 %v338
      %v436 = vpop.f32.mrb[0].mxu0
      %v437 = vadd.f32 %v295, %v436
      %v438 = vpop.f32.mrb[0].mxu0
      %v439 = vadd.f32 %v295, %v438
      %440 = vmatprep.mubr.f32.mxu0 0.0
      %441 = vmatmul.mubr.f32.gmra.mrb[0].mxu0 %v341
      %v442 = vpop.f32.mrb[0].mxu0
      %v443 = vadd.f32 %v300, %v442
      %v444 = vpop.f32.mrb[0].mxu0
      %v445 = vadd.f32 %v300, %v444
      %446 = vmatprep.mubr.f32.mxu0 0.0
      %447 = vmatmul.mubr.f32.gmra.mrb[0].mxu0 %v344
      %v448 = vpop.f32.mrb[0].mxu0
      %v449 = vadd.f32 %v305, %v448
      %v450 = vpop.f32.mrb[0].mxu0
      %v451 = vadd.f32 %v305, %v450
      %452 = vmatprep.mubr.f32.mxu0 0.0
      %453 = vmatmul.mubr.f32.gmra.mrb[0].mxu0 %v347
      %v454 = vpop.f32.mrb[0].mxu0
      %v455 = vadd.f32 %v310, %v454
      %v456 = vpop.f32.mrb[0].mxu0
      %v457 = vadd.f32 %v310, %v456
      %458 = vmatprep.mubr.f32.mxu0 0.0
      %459 = vmatmul.mubr.f32.gmra.mrb[0].mxu0 %v350
      %v460 = vpop.f32.mrb[0].mxu0
      %v461 = vadd.f32 %v315, %v460
      %v462 = vpop.f32.mrb[0].mxu0
      %v463 = vadd.f32 %v315, %v462
      %464 = vmatprep.mubr.f32.mxu0 0.0
      %465 = vmatmul.mubr.f32.gmra.mrb[0].mxu0 %v353
      %v466 = vpop.f32.mrb[0].mxu0
      %v467 = vadd.f32 %v320, %v466
      %v468 = vpop.f32.mrb[0].mxu0
      %v469 = vadd.f32 %v320, %v468
      %470 = vmatprep.mubr.f32.mxu0 0.0
      %471 = vmatmul.mubr.f32.gmra.mrb[0].mxu0 %v356
      %v472 = vpop.f32.mrb[0].mxu0
      %v473 = vadd.f32 %v325, %v472
      %v474 = vpop.f32.mrb[0].mxu0
      %v475 = vadd.f32 %v325, %v474
      %476 = vmatprep.mubr.f32.mxu0 0.0
      %477 = vmatmul.mubr.f32.gmra.mrb[0].mxu0 %v359
      %v478 = vpop.f32.mrb[0].mxu0
      %v479 = vadd.f32 %v330, %v478
      %v480 = vpop.f32.mrb[0].mxu0
      %v481 = vadd.f32 %v330, %v480
      %482 = vdwg.mxu0
      %483 = vmatprep.subr.mxu0 %v368
      %484 = vmatpush1.msra.mxu0 %v366
      %485 = vmatprep.subr.mxu0 0.0
      %486 = vmatpush1.msra.mxu0 0.0
      %487 = vmatprep.subr.mxu0 0.0
      %488 = vmatpush1.msra.mxu0 0.0
      %489 = vmatprep.subr.mxu0 0.0
      %490 = vmatpush1.msra.mxu0 0.0
      %491 = vmatprep.subr.mxu0 0.0
      %492 = vmatpush1.msra.mxu0 0.0
      %493 = vmatprep.subr.mxu0 0.0
      %494 = vmatpush1.msra.mxu0 0.0
      %495 = vmatprep.subr.mxu0 0.0
      %496 = vmatpush1.msra.mxu0 0.0
      %497 = vmatprep.subr.mxu0 0.0
      %498 = vmatpush1.msra.mxu0 0.0
      %499 = vmatprep.subr.mxu0 0.0
      %500 = vmatpush1.msra.mxu0 0.0
      %501 = vmatprep.subr.mxu0 0.0
      %502 = vmatpush1.msra.mxu0 0.0
      %503 = vmatprep.subr.mxu0 0.0
      %504 = vmatpush1.msra.mxu0 0.0
      %505 = vmatprep.subr.mxu0 0.0
      %506 = vmatpush1.msra.mxu0 0.0
      %507 = vmatprep.subr.mxu0 0.0
      %508 = vmatpush1.msra.mxu0 0.0
      %509 = vmatprep.subr.mxu0 0.0
      %510 = vmatpush1.msra.mxu0 0.0
      %511 = vmatprep.subr.mxu0 0.0
      %512 = vmatpush1.msra.mxu0 0.0
      %513 = vmatprep.subr.mxu0 0.0
      %514 = vmatpush1.msra.mxu0 0.0
      %515 = vmatprep.subr.mxu0 0.0
      %516 = vmatpush1.msra.mxu0 0.0
      %517 = vmatprep.subr.mxu0 0.0
      %518 = vmatpush1.msra.mxu0 0.0
      %519 = vmatprep.subr.mxu0 0.0
      %520 = vmatpush1.msra.mxu0 0.0
      %521 = vmatprep.subr.mxu0 0.0
      %522 = vmatpush1.msra.mxu0 0.0
      %523 = vmatprep.subr.mxu0 0.0
      %524 = vmatpush1.msra.mxu0 0.0
      %525 = vmatprep.subr.mxu0 0.0
      %526 = vmatpush1.msra.mxu0 0.0
      %527 = vmatprep.subr.mxu0 0.0
      %528 = vmatpush1.msra.mxu0 0.0
      %529 = vmatprep.subr.mxu0 0.0
      %530 = vmatpush1.msra.mxu0 0.0
      %531 = vmatprep.subr.mxu0 0.0
      %532 = vmatpush1.msra.mxu0 0.0
      %533 = vmatprep.subr.mxu0 0.0
      %534 = vmatpush1.msra.mxu0 0.0
      %535 = vmatprep.subr.mxu0 0.0
      %536 = vmatpush1.msra.mxu0 0.0
      %537 = vmatprep.subr.mxu0 0.0
      %538 = vmatpush1.msra.mxu0 0.0
      %539 = vmatprep.subr.mxu0 0.0
      %540 = vmatpush1.msra.mxu0 0.0
      %541 = vmatprep.subr.mxu0 0.0
      %542 = vmatpush1.msra.mxu0 0.0
      %543 = vmatprep.subr.mxu0 0.0
      %544 = vmatpush1.msra.mxu0 0.0
      %545 = vmatprep.subr.mxu0 0.0
      %546 = vmatpush1.msra.mxu0 0.0
      %547 = vmatprep.mubr.f32.mxu0 0.0
      %548 = vmatmul.mubr.f32.gmra.mrb[0].mxu0 %v338
      %v549 = vpop.f32.mrb[0].mxu0
      %v550 = vadd.f32 %v295, %v549
      %v551 = vpop.f32.mrb[0].mxu0
      %v552 = vadd.f32 %v295, %v551
      %553 = vmatprep.mubr.f32.mxu0 0.0
      %554 = vmatmul.mubr.f32.gmra.mrb[0].mxu0 %v341
      %v555 = vpop.f32.mrb[0].mxu0
      %v556 = vadd.f32 %v300, %v555
      %v557 = vpop.f32.mrb[0].mxu0
      %v558 = vadd.f32 %v300, %v557
      %559 = vmatprep.mubr.f32.mxu0 0.0
      %560 = vmatmul.mubr.f32.gmra.mrb[0].mxu0 %v344
      %v561 = vpop.f32.mrb[0].mxu0
      %v562 = vadd.f32 %v305, %v561
      %v563 = vpop.f32.mrb[0].mxu0
      %v564 = vadd.f32 %v305, %v563
      %565 = vmatprep.mubr.f32.mxu0 0.0
      %566 = vmatmul.mubr.f32.gmra.mrb[0].mxu0 %v347
      %v567 = vpop.f32.mrb[0].mxu0
      %v568 = vadd.f32 %v310, %v567
      %v569 = vpop.f32.mrb[0].mxu0
      %v570 = vadd.f32 %v310, %v569
      %571 = vmatprep.mubr.f32.mxu0 0.0
      %572 = vmatmul.mubr.f32.gmra.mrb[0].mxu0 %v350
      %v573 = vpop.f32.mrb[0].mxu0
      %v574 = vadd.f32 %v315, %v573
      %v575 = vpop.f32.mrb[0].mxu0
      %v576 = vadd.f32 %v315, %v575
      %577 = vmatprep.mubr.f32.mxu0 0.0
      %578 = vmatmul.mubr.f32.gmra.mrb[0].mxu0 %v353
      %v579 = vpop.f32.mrb[0].mxu0
      %v580 = vadd.f32 %v320, %v579
      %v581 = vpop.f32.mrb[0].mxu0
      %v582 = vadd.f32 %v320, %v581
      %583 = vmatprep.mubr.f32.mxu0 0.0
      %584 = vmatmul.mubr.f32.gmra.mrb[0].mxu0 %v356
      %v585 = vpop.f32.mrb[0].mxu0
      %v586 = vadd.f32 %v325, %v585
      %v587 = vpop.f32.mrb[0].mxu0
      %v588 = vadd.f32 %v325, %v587
      %589 = vmatprep.mubr.f32.mxu0 0.0
      %590 = vmatmul.mubr.f32.gmra.mrb[0].mxu0 %v359
      %v591 = vpop.f32.mrb[0].mxu0
      %v592 = vadd.f32 %v330, %v591
      %v593 = vpop.f32.mrb[0].mxu0
      %v594 = vadd.f32 %v330, %v593
      %595 = vdwg.mxu0
      %596 = vst [vmem:[%s271] sm:$0xff] %v437
      %597 = vst [vmem:[%s271 + $0x8] sm:$0xff] %v439
      %598 = vst [vmem:[%s271 + $0x10] sm:$0xff] %v550
      %599 = vst [vmem:[%s271 + $0x18] sm:$0xff] %v552
      %600 = vst [vmem:[%s271 + $0x20] sm:$0xff] %v443
      %601 = vst [vmem:[%s271 + $0x28] sm:$0xff] %v445
      %602 = vst [vmem:[%s271 + $0x30] sm:$0xff] %v556
      %603 = vst [vmem:[%s271 + $0x38] sm:$0xff] %v558
      %604 = vst [vmem:[%s271 + $0x40] sm:$0xff] %v449
      %605 = vst [vmem:[%s271 + $0x48] sm:$0xff] %v451
      %606 = vst [vmem:[%s271 + $0x50] sm:$0xff] %v562
      %607 = vst [vmem:[%s271 + $0x58] sm:$0xff] %v564
      %608 = vst [vmem:[%s271 + $0x60] sm:$0xff] %v455
      %609 = vst [vmem:[%s271 + $0x68] sm:$0xff] %v457
      %610 = vst [vmem:[%s271 + $0x70] sm:$0xff] %v568
      %611 = vst [vmem:[%s271 + $0x78] sm:$0xff] %v570
      %612 = vst [vmem:[%s271 + $0x80] sm:$0xff] %v461
      %613 = vst [vmem:[%s271 + $0x88] sm:$0xff] %v463
      %614 = vst [vmem:[%s271 + $0x90] sm:$0xff] %v574
      %615 = vst [vmem:[%s271 + $0x98] sm:$0xff] %v576
      %616 = vst [vmem:[%s271 + $0xa0] sm:$0xff] %v467
      %617 = vst [vmem:[%s271 + $0xa8] sm:$0xff] %v469
      %618 = vst [vmem:[%s271 + $0xb0] sm:$0xff] %v580
      %619 = vst [vmem:[%s271 + $0xb8] sm:$0xff] %v582
      %620 = vst [vmem:[%s271 + $0xc0] sm:$0xff] %v473
      %621 = vst [vmem:[%s271 + $0xc8] sm:$0xff] %v475
      %622 = vst [vmem:[%s271 + $0xd0] sm:$0xff] %v586
      %623 = vst [vmem:[%s271 + $0xd8] sm:$0xff] %v588
      %624 = vst [vmem:[%s271 + $0xe0] sm:$0xff] %v479
      %625 = vst [vmem:[%s271 + $0xe8] sm:$0xff] %v481
      %626 = vst [vmem:[%s271 + $0xf0] sm:$0xff] %v592
      %627 = vst [vmem:[%s271 + $0xf8] sm:$0xff] %v594
      %s628 = smul.u32 8, %s20
      %s629 = smul.u32 4, %s21
      %p630 = scmp.lt.s32.totalorder %s19, 1
      %s631 = scalar_select %p630, %s19, 1
      %p632 = scmp.lt.s32.totalorder %s628, 7
      %s633 = scalar_select %p632, %s628, 7
      %p634 = scmp.lt.s32.totalorder %s629, 3
      %s635 = scalar_select %p634, %s629, 3
      %s636 = smul.addr %s633, 4
      %s637 = sadd.s32 %s635, %s636
      %s638 = smul.addr %s631, 32
      %s639 = sadd.s32 %s637, %s638
      %s640 = smul.addr %s639, 8
      %s641 = scalar_lea.vmem %s3, %s640
      // Predicated region
      $region33: #{single_deconv3d_block.1} parent=31 // pred_check
        %p642 = pneg %p135
      $region34: #{single_deconv3d_block.1} parent=31 // pred_check_branch
        %644 = sbr.rel (%p642) target = $region36
      $region35: #{single_deconv3d_block.1} parent=31 // pred_region
        %s645 = smul.u32 8, %s20
        %s646 = smul.u32 4, %s21
      $region36: #{single_deconv3d_block.1} parent=31 // pred_fallthru
        _
    $region32: #{single_deconv3d_block.1} parent=5 // pred_fallthru
      _
    %p647 = scmp.le.s32.totalorder 2, %s9
    // Predicated region
    $region37: #{single_deconv3d_block.1} parent=5 // pred_check
      %p648 = pneg %p647
    $region38: #{single_deconv3d_block.1} parent=5 // pred_check_branch
      %650 = sbr.rel (%p648) target = $region40
    $region39: #{single_deconv3d_block.1} parent=5 // pred_region
      %s651 = ssub.s32 %s9, 2
      // Predicated region
      $region41: #{single_deconv3d_block.1} parent=39 // pred_check
        %p652 = pneg %p141
      $region42: #{single_deconv3d_block.1} parent=39 // pred_check_branch
        %654 = sbr.rel (%p652) target = $region44
      $region43: #{single_deconv3d_block.1} parent=39 // pred_region
        %s655 = smul.u32 8, %s23
        %s656 = smul.u32 4, %s24
        %p657 = scmp.lt.s32.totalorder %s22, 1
        %s658 = scalar_select %p657, %s22, 1
        %p659 = scmp.lt.s32.totalorder %s655, 7
        %s660 = scalar_select %p659, %s655, 7
        %p661 = scmp.lt.s32.totalorder %s656, 3
        %s662 = scalar_select %p661, %s656, 3
        %s663 = smul.addr %s660, 4
        %s664 = sadd.s32 %s662, %s663
        %s665 = smul.addr %s658, 32
        %s666 = sadd.s32 %s664, %s665
        %s667 = smul.addr %s666, 8
        %s668 = scalar_lea.vmem %s3, %s667
      $region44: #{single_deconv3d_block.1} parent=39 // pred_fallthru
        _
    $region40: #{single_deconv3d_block.1} parent=5 // pred_fallthru
      _
  $region6: #{single_deconv3d_block.1} parent=0 // loop_footer
    %s13 = sadd.s32 1, %s9
  $region7: #{single_deconv3d_block.1} parent=0 // loop_footer_branch
    %8 = sbr.rel target = $region3
  $region8: #{single_deconv3d_block.1} parent=0 // loop_exit
    _

</llo_original>
